<compile_context>
chip_gen: v5e
topology: v5e:2x2
jax: 0.10.0
libtpu: 0.0.40
codegen_flags: <defaults>
</compile_context>

<pallas_src>
import functools
import math

import numpy as np
import jax
import jax.numpy as jnp
from jax.experimental import pallas as pl
from jax.experimental.pallas import tpu as pltpu


# ------------------------------ Pallas kernel ------------------------------ #

def fused_kernel(h1_ref, ws_ref, p_ref, x_ref, w_ref,
                 h2_ref, s_ref, o_ref, *,
                 wsty, hid, cinp, ksize, wp, hwp_pad):
    """Fused GRUCell + EqualLinear(sqrt_softmax) + modulated/demodulated conv.

    Inputs:
      h1_ref : (B, HID)  f32   previous hidden state
      ws_ref : (B, WSTY) f32   current w-style input
      p_ref  : (3*WSTY + 3*HID + 8 + HID + 8, HID) f32  packed style-path params:
               [wih_r^T | wih_z^T | wih_n^T | whh_r^T | whh_z^T | whh_n^T |
                bias block (r,z,in,hn rows) | aff_w^T (cols>=Cin zero) |
                aff_b row (cols>=Cin = -1e30 softmax mask)]
      x_ref  : (B, Cinp, L) f32  zero-padded input, spatial flattened so tap (dy,dx)
               is a lane shift of dy*Wp+dx; Cinp is Cin padded to sublane (8).
      w_ref  : (Cout, k*k*Cinp) bf16  demodulated base weight, col (dy*k+dx)*Cinp+c.

    Outputs: h2 (B, HID) f32, style (B, Cinp) f32, out (Cout, B*hwp_pad) f32.
    """
    f32 = jnp.float32
    h1 = h1_ref[...]
    w2 = ws_ref[...]

    # Static row offsets into the packed parameter slab (all multiples of 8).
    o3 = 3 * wsty
    o6 = o3 + 3 * hid
    o7 = o6 + 8
    o8 = o7 + hid

    wih_r = p_ref[0:wsty, :]
    wih_z = p_ref[wsty:2 * wsty, :]
    wih_n = p_ref[2 * wsty:o3, :]
    whh_r = p_ref[o3:o3 + hid, :]
    whh_z = p_ref[o3 + hid:o3 + 2 * hid, :]
    whh_n = p_ref[o3 + 2 * hid:o6, :]
    bias = p_ref[o6:o6 + 8, :]
    aw = p_ref[o7:o8, :]
    ab = p_ref[o8:o8 + 1, :]

    b_r, b_z = bias[0:1], bias[1:2]
    b_in, b_hn = bias[2:3], bias[3:4]

    # ---------------- GRUCell (f32, per-gate blocks -> no lane slicing) ----------
    r = jax.nn.sigmoid(jnp.dot(w2, wih_r, preferred_element_type=f32)
                       + jnp.dot(h1, whh_r, preferred_element_type=f32) + b_r)
    z = jax.nn.sigmoid(jnp.dot(w2, wih_z, preferred_element_type=f32)
                       + jnp.dot(h1, whh_z, preferred_element_type=f32) + b_z)
    n = jnp.tanh(jnp.dot(w2, wih_n, preferred_element_type=f32) + b_in
                 + r * (jnp.dot(h1, whh_n, preferred_element_type=f32) + b_hn))
    h2 = (1.0 - z) * n + z * h1
    h2_ref[...] = h2.astype(h2_ref.dtype)

    # ---------------- EqualLinear + sqrt(softmax) over the first Cin logits ------
    lin = jnp.dot(h2, aw, preferred_element_type=f32) + ab      # padded logits = -1e30
    m = jnp.max(lin, axis=1, keepdims=True)
    e_half = jnp.exp(0.5 * (lin - m))                           # exp((lin-m)/2)
    e = e_half * e_half                                         # exp(lin-m), VPU mul
    style_full = e_half * jax.lax.rsqrt(jnp.sum(e, axis=1, keepdims=True))
    style = style_full[:, :cinp]                                # (B, Cinp); pad cols == 0
    s_ref[...] = style.astype(s_ref.dtype)

    # ---------------- conv: modulate input, im2col, one batch-folded MXU dot -----
    x = x_ref[...] * style[:, :, None]                          # (B, Cinp, L) f32
    batch = x.shape[0]
    offsets = [dy * wp + dx for dy in range(ksize) for dx in range(ksize)]
    cols = []
    for b in range(batch):                                      # B small & static
        xb = x[b]                                               # (Cinp, L)
        taps = [xb[:, off:off + hwp_pad] for off in offsets]    # (Cinp, hwp_pad) each
        cols.append(jnp.concatenate(taps, axis=0))              # (k*k*Cinp, hwp_pad)
    patches = jnp.concatenate(cols, axis=1).astype(jnp.bfloat16)  # (K, B*hwp_pad)
    acc = jnp.dot(w_ref[...], patches,
                  preferred_element_type=f32)                   # (Cout, B*hwp_pad) f32
    o_ref[...] = acc.astype(o_ref.dtype)                        # single unmasked store


# ------------------------------- Wrapper ----------------------------------- #

def _pack_style_params(params, HID, WSTY, C_in):
    """Pack GRUCell + EqualLinear params into one (R, HID) f32 slab (single DMA)."""
    wih = params["gru_wih"].astype(jnp.float32)     # (3*HID, WSTY), [r|z|n] row blocks
    whh = params["gru_whh"].astype(jnp.float32)     # (3*HID, HID)
    bih = params["gru_bih"].astype(jnp.float32)
    bhh = params["gru_bhh"].astype(jnp.float32)

    blocks = [wih[g * HID:(g + 1) * HID, :].T for g in range(3)]   # (WSTY, HID) x3
    blocks += [whh[g * HID:(g + 1) * HID, :].T for g in range(3)]  # (HID, HID)  x3

    bias_blk = jnp.zeros((8, HID), jnp.float32)
    bias_blk = bias_blk.at[0].set(bih[:HID] + bhh[:HID])           # r
    bias_blk = bias_blk.at[1].set(bih[HID:2 * HID] + bhh[HID:2 * HID])  # z
    bias_blk = bias_blk.at[2].set(bih[2 * HID:])                   # b_in
    bias_blk = bias_blk.at[3].set(bhh[2 * HID:])                   # b_hn (inside r*)
    blocks.append(bias_blk)

    aff_scale = 1.0 / math.sqrt(HID)                # EqualLinear scale (lr_mul=1)
    aw = jnp.zeros((HID, HID), jnp.float32)
    aw = aw.at[:, :C_in].set((params["aff_w"].astype(jnp.float32) * aff_scale).T)
    blocks.append(aw)

    ab = jnp.full((8, HID), -1e30, jnp.float32)     # -1e30 masks padded softmax cols
    ab = ab.at[0, :C_in].set(params["aff_b"].astype(jnp.float32))
    blocks.append(ab)
    return jnp.concatenate(blocks, axis=0)          # (3*WSTY + 3*HID + 8 + HID + 8, HID)


def gru_modulated_conv2d(h1, x_nchw, w_style, params, kernel_size,
                         demodulate=True, eps=1e-8):
    """Fused-path forward of GRUModulatedConv2d (upsample=downsample=False).

    Returns (h2, out_nchw, style) exactly like the PyTorch module.
    """
    B, C_in, H, W = x_nchw.shape
    HID = h1.shape[1]
    WSTY = w_style.shape[1]
    C_out = params["conv_w"].shape[1]
    k = kernel_size
    pad = k // 2
    Hp, Wp = H + 2 * pad, W + 2 * pad

    SUB = 8
    C_inp = ((max(C_in, SUB) + SUB - 1) // SUB) * SUB        # channels padded to sublane
    HWp = H * Wp
    HWp_pad = ((HWp + 127) // 128) * 128                     # lane-dense per-batch width
    max_off = (k - 1) * Wp + (k - 1)
    L_in = ((max_off + HWp_pad + 127) // 128) * 128          # padded flat spatial length

    assert C_inp <= HID and HID % 8 == 0 and WSTY % 8 == 0

    # ---- packed style-path params (one DMA) ----
    p_packed = _pack_style_params(params, HID, WSTY, C_in)

    # ---- conv weight: demodulation hoisted (style-free, per-(o,i)), channel-pad, bf16
    w = params["conv_w"][0].astype(jnp.float32)              # (Cout, Cin, k, k)
    if demodulate:
        norm = jax.lax.rsqrt(jnp.sum(w * w, axis=(2, 3)) + eps)   # (Cout, Cin)
        w = w * norm[:, :, None, None]
    w = jnp.pad(w, ((0, 0), (0, C_inp - C_in), (0, 0), (0, 0)))
    w_flat = jnp.transpose(w, (0, 2, 3, 1)).reshape(C_out, k * k * C_inp)
    w_flat = w_flat.astype(jnp.bfloat16)

    # ---- input: zero-pad spatial, flatten onto lane axis, pad channel & lane dims
    x_pad = jnp.pad(x_nchw.astype(jnp.float32),
                    ((0, 0), (0, 0), (pad, pad), (pad, pad)))
    x_flat = x_pad.reshape(B, C_in, Hp * Wp)
    x_flat = jnp.pad(x_flat, ((0, 0), (0, C_inp - C_in), (0, L_in - Hp * Wp)))

    vmem = pl.BlockSpec(memory_space=pltpu.MemorySpace.VMEM)
    h2, style_p, out_flat = pl.pallas_call(
        functools.partial(fused_kernel, wsty=WSTY, hid=HID, cinp=C_inp,
                          ksize=k, wp=Wp, hwp_pad=HWp_pad),
        out_shape=(jax.ShapeDtypeStruct((B, HID), jnp.float32),
                   jax.ShapeDtypeStruct((B, C_inp), jnp.float32),
                   jax.ShapeDtypeStruct((C_out, B * HWp_pad), jnp.float32)),
        in_specs=[vmem] * 5,
        out_specs=(vmem, vmem, vmem),
    )(h1, w_style, p_packed, x_flat, w_flat)

    # Pure layout plumbing: drop padding, recover NCHW.
    style = style_p[:, :C_in]
    out = out_flat.reshape(C_out, B, HWp_pad)[:, :, :HWp]
    out = out.reshape(C_out, B, H, Wp)[:, :, :, :W]
    out = jnp.transpose(out, (1, 0, 2, 3))
    return h2, out, style


# ------------------------------ Reference ----------------------------------- #

def reference(h1, x_nchw, w_style, params, kernel_size, eps=1e-8):
    """Pure-JAX (f32) re-implementation of the PyTorch fused forward for validation."""
    B, C_in, H, W = x_nchw.shape
    HID = h1.shape[1]
    k = kernel_size
    pad = k // 2

    gi = w_style @ params["gru_wih"].T + params["gru_bih"]
    gh = h1 @ params["gru_whh"].T + params["gru_bhh"]
    r = jax.nn.sigmoid(gi[:, :HID] + gh[:, :HID])
    z = jax.nn.sigmoid(gi[:, HID:2 * HID] + gh[:, HID:2 * HID])
    n = jnp.tanh(gi[:, 2 * HID:] + r * gh[:, 2 * HID:])
    h2 = (1.0 - z) * n + z * h1

    lin = h2 @ (params["aff_w"] * (1.0 / math.sqrt(HID))).T + params["aff_b"]
    style = jnp.sqrt(jax.nn.softmax(lin, axis=1))

    w = params["conv_w"][0]                                        # (O, I, k, k)
    norm = jax.lax.rsqrt(jnp.sum(w ** 2, axis=(2, 3)) + eps)       # (O, I)
    w_d = w * norm[:, :, None, None]

    outs = []
    for b in range(B):
        wb = w_d * style[b][None, :, None, None]
        ob = jax.lax.conv_general_dilated(
            x_nchw[b:b + 1], wb, window_strides=(1, 1),
            padding=[(pad, pad), (pad, pad)],
            dimension_numbers=("NCHW", "OIHW", "NCHW"))
        outs.append(ob)
    out = jnp.concatenate(outs, axis=0)
    return h2, out, style


# --------------------------------- Main ------------------------------------- #

if __name__ == "__main__":
    B, C_in, C_out, K = 2, 4, 8, 3
    H = W = 16
    HID = 32    # prev_style_hidden_dim
    WSTY = 32   # w_style_dim

    key = jax.random.PRNGKey(0)
    ks = jax.random.split(key, 8)
    params = {
        "gru_wih": jax.random.normal(ks[0], (3 * HID, WSTY), jnp.float32) / math.sqrt(HID),
        "gru_whh": jax.random.normal(ks[1], (3 * HID, HID), jnp.float32) / math.sqrt(HID),
        "gru_bih": jax.random.normal(ks[2], (3 * HID,), jnp.float32) * 0.1,
        "gru_bhh": jax.random.normal(ks[3], (3 * HID,), jnp.float32) * 0.1,
        "aff_w":   jax.random.normal(ks[4], (C_in, HID), jnp.float32),
        "aff_b":   jnp.zeros((C_in,), jnp.float32),                 # bias_init = 0
        "conv_w":  jax.random.normal(ks[5], (1, C_out, C_in, K, K), jnp.float32),
    }
    h1 = jax.random.normal(ks[6], (B, HID), jnp.float32)
    x = jax.random.normal(ks[7], (B, C_in, H, W), jnp.float32)
    w_style = jax.random.normal(jax.random.PRNGKey(42), (B, WSTY), jnp.float32)

    fwd = jax.jit(functools.partial(gru_modulated_conv2d, kernel_size=K))
    h2, out, style = fwd(h1, x, w_style, params)
    jax.block_until_ready((h2, out, style))

    h2_r, out_r, style_r = reference(h1, x, w_style, params, K)
    # style / h2 path is f32 -> tight; conv uses bf16 MXU operands with f32 accum.
    assert np.allclose(np.asarray(h2), np.asarray(h2_r), rtol=1e-2, atol=1e-2)
    assert np.allclose(np.asarray(style), np.asarray(style_r), rtol=1e-2, atol=1e-2)
    assert np.allclose(np.asarray(out), np.asarray(out_r), rtol=2e-2, atol=2e-2)

    print("KERNEL_OK")
</pallas_src>

<mosaic_0001>
module attributes {stable_mosaic.version = 11 : i64} {
  func.func @fused_kernel(%arg0: memref<2x32xf32, #tpu.memory_space<vmem>>, %arg1: memref<2x32xf32, #tpu.memory_space<vmem>>, %arg2: memref<240x32xf32, #tpu.memory_space<vmem>>, %arg3: memref<2x8x512xf32, #tpu.memory_space<vmem>>, %arg4: memref<8x72xbf16, #tpu.memory_space<vmem>>, %arg5: memref<2x32xf32, #tpu.memory_space<vmem>>, %arg6: memref<2x8xf32, #tpu.memory_space<vmem>>, %arg7: memref<8x768xf32, #tpu.memory_space<vmem>>) attributes {dimension_semantics = [], scalar_prefetch = 0 : i64, scratch_operands = 0 : i64, tpu.core_type = #tpu.core_type<tc>} {
    %c0 = arith.constant 0 : index
    %c0_0 = arith.constant 0 : index
    %0 = vector.load %arg0[%c0, %c0_0] : memref<2x32xf32, #tpu.memory_space<vmem>>, vector<2x32xf32>
    %c0_1 = arith.constant 0 : index
    %c0_2 = arith.constant 0 : index
    %1 = vector.load %arg1[%c0_1, %c0_2] : memref<2x32xf32, #tpu.memory_space<vmem>>, vector<2x32xf32>
    %c0_3 = arith.constant 0 : index
    %c0_4 = arith.constant 0 : index
    %2 = vector.load %arg2[%c0_3, %c0_4] : memref<240x32xf32, #tpu.memory_space<vmem>>, vector<32x32xf32>
    %c32 = arith.constant 32 : index
    %c0_5 = arith.constant 0 : index
    %3 = vector.load %arg2[%c32, %c0_5] : memref<240x32xf32, #tpu.memory_space<vmem>>, vector<32x32xf32>
    %c64 = arith.constant 64 : index
    %c0_6 = arith.constant 0 : index
    %4 = vector.load %arg2[%c64, %c0_6] : memref<240x32xf32, #tpu.memory_space<vmem>>, vector<32x32xf32>
    %c96 = arith.constant 96 : index
    %c0_7 = arith.constant 0 : index
    %5 = vector.load %arg2[%c96, %c0_7] : memref<240x32xf32, #tpu.memory_space<vmem>>, vector<32x32xf32>
    %c128 = arith.constant 128 : index
    %c0_8 = arith.constant 0 : index
    %6 = vector.load %arg2[%c128, %c0_8] : memref<240x32xf32, #tpu.memory_space<vmem>>, vector<32x32xf32>
    %c160 = arith.constant 160 : index
    %c0_9 = arith.constant 0 : index
    %7 = vector.load %arg2[%c160, %c0_9] : memref<240x32xf32, #tpu.memory_space<vmem>>, vector<32x32xf32>
    %c192 = arith.constant 192 : index
    %c0_10 = arith.constant 0 : index
    %8 = vector.load %arg2[%c192, %c0_10] : memref<240x32xf32, #tpu.memory_space<vmem>>, vector<8x32xf32>
    %c200 = arith.constant 200 : index
    %c0_11 = arith.constant 0 : index
    %9 = vector.load %arg2[%c200, %c0_11] : memref<240x32xf32, #tpu.memory_space<vmem>>, vector<32x32xf32>
    %c232 = arith.constant 232 : index
    %c0_12 = arith.constant 0 : index
    %10 = vector.load %arg2[%c232, %c0_12] : memref<240x32xf32, #tpu.memory_space<vmem>>, vector<1x32xf32>
    %11 = vector.extract_strided_slice %8 {offsets = [0, 0], sizes = [1, 32], strides = [1, 1]} : vector<8x32xf32> to vector<1x32xf32>
    %12 = vector.extract_strided_slice %8 {offsets = [1, 0], sizes = [1, 32], strides = [1, 1]} : vector<8x32xf32> to vector<1x32xf32>
    %13 = vector.extract_strided_slice %8 {offsets = [2, 0], sizes = [1, 32], strides = [1, 1]} : vector<8x32xf32> to vector<1x32xf32>
    %14 = vector.extract_strided_slice %8 {offsets = [3, 0], sizes = [1, 32], strides = [1, 1]} : vector<8x32xf32> to vector<1x32xf32>
    %cst = arith.constant dense<0.000000e+00> : vector<2x32xf32>
    %15 = tpu.matmul %1, %2, %cst {dimension_numbers = #tpu.dot_dimension_numbers<[1], [0], [0], [1], [0, 0, 1, 1], [], []>} : vector<2x32xf32>, vector<32x32xf32>, vector<2x32xf32> -> vector<2x32xf32>
    %cst_13 = arith.constant dense<0.000000e+00> : vector<2x32xf32>
    %16 = tpu.matmul %0, %5, %cst_13 {dimension_numbers = #tpu.dot_dimension_numbers<[1], [0], [0], [1], [0, 0, 1, 1], [], []>} : vector<2x32xf32>, vector<32x32xf32>, vector<2x32xf32> -> vector<2x32xf32>
    %17 = arith.addf %15, %16 : vector<2x32xf32>
    %18 = vector.broadcast %11 : vector<1x32xf32> to vector<2x32xf32>
    %19 = arith.addf %17, %18 : vector<2x32xf32>
    %20 = arith.negf %19 : vector<2x32xf32>
    %21 = math.exp %20 : vector<2x32xf32>
    %cst_14 = arith.constant 1.000000e+00 : f32
    %22 = vector.broadcast %cst_14 : f32 to vector<2x32xf32>
    %23 = arith.addf %22, %21 : vector<2x32xf32>
    %24 = arith.divf %22, %23 : vector<2x32xf32>
    %cst_15 = arith.constant dense<0.000000e+00> : vector<2x32xf32>
    %25 = tpu.matmul %1, %3, %cst_15 {dimension_numbers = #tpu.dot_dimension_numbers<[1], [0], [0], [1], [0, 0, 1, 1], [], []>} : vector<2x32xf32>, vector<32x32xf32>, vector<2x32xf32> -> vector<2x32xf32>
    %cst_16 = arith.constant dense<0.000000e+00> : vector<2x32xf32>
    %26 = tpu.matmul %0, %6, %cst_16 {dimension_numbers = #tpu.dot_dimension_numbers<[1], [0], [0], [1], [0, 0, 1, 1], [], []>} : vector<2x32xf32>, vector<32x32xf32>, vector<2x32xf32> -> vector<2x32xf32>
    %27 = arith.addf %25, %26 : vector<2x32xf32>
    %28 = vector.broadcast %12 : vector<1x32xf32> to vector<2x32xf32>
    %29 = arith.addf %27, %28 : vector<2x32xf32>
    %30 = arith.negf %29 : vector<2x32xf32>
    %31 = math.exp %30 : vector<2x32xf32>
    %cst_17 = arith.constant 1.000000e+00 : f32
    %32 = vector.broadcast %cst_17 : f32 to vector<2x32xf32>
    %33 = arith.addf %32, %31 : vector<2x32xf32>
    %34 = arith.divf %32, %33 : vector<2x32xf32>
    %cst_18 = arith.constant dense<0.000000e+00> : vector<2x32xf32>
    %35 = tpu.matmul %1, %4, %cst_18 {dimension_numbers = #tpu.dot_dimension_numbers<[1], [0], [0], [1], [0, 0, 1, 1], [], []>} : vector<2x32xf32>, vector<32x32xf32>, vector<2x32xf32> -> vector<2x32xf32>
    %36 = vector.broadcast %13 : vector<1x32xf32> to vector<2x32xf32>
    %37 = arith.addf %35, %36 : vector<2x32xf32>
    %cst_19 = arith.constant dense<0.000000e+00> : vector<2x32xf32>
    %38 = tpu.matmul %0, %7, %cst_19 {dimension_numbers = #tpu.dot_dimension_numbers<[1], [0], [0], [1], [0, 0, 1, 1], [], []>} : vector<2x32xf32>, vector<32x32xf32>, vector<2x32xf32> -> vector<2x32xf32>
    %39 = vector.broadcast %14 : vector<1x32xf32> to vector<2x32xf32>
    %40 = arith.addf %38, %39 : vector<2x32xf32>
    %41 = arith.mulf %24, %40 : vector<2x32xf32>
    %42 = arith.addf %37, %41 : vector<2x32xf32>
    %43 = math.tanh %42 : vector<2x32xf32>
    %cst_20 = arith.constant 1.000000e+00 : f32
    %44 = vector.broadcast %cst_20 : f32 to vector<2x32xf32>
    %45 = arith.subf %44, %34 : vector<2x32xf32>
    %46 = arith.mulf %45, %43 : vector<2x32xf32>
    %47 = arith.mulf %34, %0 : vector<2x32xf32>
    %48 = arith.addf %46, %47 : vector<2x32xf32>
    %c0_21 = arith.constant 0 : index
    %c0_22 = arith.constant 0 : index
    %49 = vector.load %arg5[%c0_21, %c0_22] : memref<2x32xf32, #tpu.memory_space<vmem>>, vector<2x32xf32>
    tpu.vector_store %arg5[%c0_21, %c0_22], %48 {strides = array<i32>} : memref<2x32xf32, #tpu.memory_space<vmem>>, vector<2x32xf32>,
    %cst_23 = arith.constant dense<0.000000e+00> : vector<2x32xf32>
    %50 = tpu.matmul %48, %9, %cst_23 {dimension_numbers = #tpu.dot_dimension_numbers<[1], [0], [0], [1], [0, 0, 1, 1], [], []>} : vector<2x32xf32>, vector<32x32xf32>, vector<2x32xf32> -> vector<2x32xf32>
    %51 = vector.broadcast %10 : vector<1x32xf32> to vector<2x32xf32>
    %52 = arith.addf %50, %51 : vector<2x32xf32>
    %cst_24 = arith.constant dense<0xFF800000> : vector<2xf32>
    %53 = vector.multi_reduction <maximumf>, %52, %cst_24 [1] : vector<2x32xf32> to vector<2xf32>
    %54 = vector.shape_cast %53 : vector<2xf32> to vector<2x1xf32>
    %55 = vector.broadcast %54 : vector<2x1xf32> to vector<2x32xf32>
    %56 = arith.subf %52, %55 : vector<2x32xf32>
    %cst_25 = arith.constant 5.000000e-01 : f32
    %57 = vector.broadcast %cst_25 : f32 to vector<2x32xf32>
    %58 = arith.mulf %57, %56 : vector<2x32xf32>
    %59 = math.exp %58 : vector<2x32xf32>
    %60 = arith.mulf %59, %59 : vector<2x32xf32>
    %cst_26 = arith.constant dense<0.000000e+00> : vector<2xf32>
    %61 = vector.multi_reduction <add>, %60, %cst_26 [1] : vector<2x32xf32> to vector<2xf32>
    %62 = vector.shape_cast %61 : vector<2xf32> to vector<2x1xf32>
    %63 = math.rsqrt %62 : vector<2x1xf32>
    %64 = vector.broadcast %63 : vector<2x1xf32> to vector<2x32xf32>
    %65 = arith.mulf %59, %64 : vector<2x32xf32>
    %66 = vector.extract_strided_slice %65 {offsets = [0, 0], sizes = [2, 8], strides = [1, 1]} : vector<2x32xf32> to vector<2x8xf32>
    %c0_27 = arith.constant 0 : index
    %c0_28 = arith.constant 0 : index
    %67 = vector.load %arg6[%c0_27, %c0_28] : memref<2x8xf32, #tpu.memory_space<vmem>>, vector<2x8xf32>
    tpu.vector_store %arg6[%c0_27, %c0_28], %66 {strides = array<i32>} : memref<2x8xf32, #tpu.memory_space<vmem>>, vector<2x8xf32>,
    %c0_29 = arith.constant 0 : index
    %c0_30 = arith.constant 0 : index
    %c0_31 = arith.constant 0 : index
    %68 = vector.load %arg3[%c0_29, %c0_30, %c0_31] : memref<2x8x512xf32, #tpu.memory_space<vmem>>, vector<2x8x512xf32>
    %69 = vector.shape_cast %66 : vector<2x8xf32> to vector<2x8x1xf32>
    %70 = vector.broadcast %69 : vector<2x8x1xf32> to vector<2x8x512xf32>
    %71 = arith.mulf %68, %70 : vector<2x8x512xf32>
    %72 = vector.extract_strided_slice %71 {offsets = [0, 0, 0], sizes = [1, 8, 512], strides = [1, 1, 1]} : vector<2x8x512xf32> to vector<1x8x512xf32>
    %73 = vector.shape_cast %72 : vector<1x8x512xf32> to vector<8x512xf32>
    %74 = vector.extract_strided_slice %73 {offsets = [0, 0], sizes = [8, 384], strides = [1, 1]} : vector<8x512xf32> to vector<8x384xf32>
    %75 = vector.extract_strided_slice %73 {offsets = [0, 1], sizes = [8, 384], strides = [1, 1]} : vector<8x512xf32> to vector<8x384xf32>
    %76 = vector.extract_strided_slice %73 {offsets = [0, 2], sizes = [8, 384], strides = [1, 1]} : vector<8x512xf32> to vector<8x384xf32>
    %77 = vector.extract_strided_slice %73 {offsets = [0, 18], sizes = [8, 384], strides = [1, 1]} : vector<8x512xf32> to vector<8x384xf32>
    %78 = vector.extract_strided_slice %73 {offsets = [0, 19], sizes = [8, 384], strides = [1, 1]} : vector<8x512xf32> to vector<8x384xf32>
    %79 = vector.extract_strided_slice %73 {offsets = [0, 20], sizes = [8, 384], strides = [1, 1]} : vector<8x512xf32> to vector<8x384xf32>
    %80 = vector.extract_strided_slice %73 {offsets = [0, 36], sizes = [8, 384], strides = [1, 1]} : vector<8x512xf32> to vector<8x384xf32>
    %81 = vector.extract_strided_slice %73 {offsets = [0, 37], sizes = [8, 384], strides = [1, 1]} : vector<8x512xf32> to vector<8x384xf32>
    %82 = vector.extract_strided_slice %73 {offsets = [0, 38], sizes = [8, 384], strides = [1, 1]} : vector<8x512xf32> to vector<8x384xf32>
    %83 = tpu.concatenate %74, %75, %76, %77, %78, %79, %80, %81, %82 in 0 : vector<8x384xf32>, vector<8x384xf32>, vector<8x384xf32>, vector<8x384xf32>, vector<8x384xf32>, vector<8x384xf32>, vector<8x384xf32>, vector<8x384xf32>, vector<8x384xf32> -> vector<72x384xf32>
    %84 = vector.extract_strided_slice %71 {offsets = [1, 0, 0], sizes = [1, 8, 512], strides = [1, 1, 1]} : vector<2x8x512xf32> to vector<1x8x512xf32>
    %85 = vector.shape_cast %84 : vector<1x8x512xf32> to vector<8x512xf32>
    %86 = vector.extract_strided_slice %85 {offsets = [0, 0], sizes = [8, 384], strides = [1, 1]} : vector<8x512xf32> to vector<8x384xf32>
    %87 = vector.extract_strided_slice %85 {offsets = [0, 1], sizes = [8, 384], strides = [1, 1]} : vector<8x512xf32> to vector<8x384xf32>
    %88 = vector.extract_strided_slice %85 {offsets = [0, 2], sizes = [8, 384], strides = [1, 1]} : vector<8x512xf32> to vector<8x384xf32>
    %89 = vector.extract_strided_slice %85 {offsets = [0, 18], sizes = [8, 384], strides = [1, 1]} : vector<8x512xf32> to vector<8x384xf32>
    %90 = vector.extract_strided_slice %85 {offsets = [0, 19], sizes = [8, 384], strides = [1, 1]} : vector<8x512xf32> to vector<8x384xf32>
    %91 = vector.extract_strided_slice %85 {offsets = [0, 20], sizes = [8, 384], strides = [1, 1]} : vector<8x512xf32> to vector<8x384xf32>
    %92 = vector.extract_strided_slice %85 {offsets = [0, 36], sizes = [8, 384], strides = [1, 1]} : vector<8x512xf32> to vector<8x384xf32>
    %93 = vector.extract_strided_slice %85 {offsets = [0, 37], sizes = [8, 384], strides = [1, 1]} : vector<8x512xf32> to vector<8x384xf32>
    %94 = vector.extract_strided_slice %85 {offsets = [0, 38], sizes = [8, 384], strides = [1, 1]} : vector<8x512xf32> to vector<8x384xf32>
    %95 = tpu.concatenate %86, %87, %88, %89, %90, %91, %92, %93, %94 in 0 : vector<8x384xf32>, vector<8x384xf32>, vector<8x384xf32>, vector<8x384xf32>, vector<8x384xf32>, vector<8x384xf32>, vector<8x384xf32>, vector<8x384xf32>, vector<8x384xf32> -> vector<72x384xf32>
    %96 = tpu.concatenate %83, %95 in 1 : vector<72x384xf32>, vector<72x384xf32> -> vector<72x768xf32>
    %97 = arith.truncf %96 : vector<72x768xf32> to vector<72x768xbf16>
    %c0_32 = arith.constant 0 : index
    %c0_33 = arith.constant 0 : index
    %98 = vector.load %arg4[%c0_32, %c0_33] : memref<8x72xbf16, #tpu.memory_space<vmem>>, vector<8x72xbf16>
    %cst_34 = arith.constant dense<0.000000e+00> : vector<8x768xf32>
    %99 = tpu.matmul %98, %97, %cst_34 {dimension_numbers = #tpu.dot_dimension_numbers<[1], [0], [0], [1], [0, 0, 1, 1], [], []>} : vector<8x72xbf16>, vector<72x768xbf16>, vector<8x768xf32> -> vector<8x768xf32>
    %c0_35 = arith.constant 0 : index
    %c0_36 = arith.constant 0 : index
    %100 = vector.load %arg7[%c0_35, %c0_36] : memref<8x768xf32, #tpu.memory_space<vmem>>, vector<8x768xf32>
    tpu.vector_store %arg7[%c0_35, %c0_36], %99 {strides = array<i32>} : memref<8x768xf32, #tpu.memory_space<vmem>>, vector<8x768xf32>,
    return
  }
}

</mosaic_0001>

<llo_original>
// kernel: gru_modulated_conv2d.1
$region0: #{gru_modulated_conv2d.1}
  #allocation0 [shape = 'u32[]', space=smem, size = 0x4, offset = 0x4, fixed_abs, tag = 'smem constant byte address 0x4 - core index']
  #allocation1 [shape = 'u32[72,128]{1,0:T(1,128)}', space=vmem, size = 0x9000, scoped, tag = 'internal scratch']
  %s0 = inlined_call_operand.vmem [shape: f32[2,32], index: 0, kind: input, shape index: {}]
  %s1 = inlined_call_operand.vmem [shape: f32[2,32], index: 1, kind: input, shape index: {}]
  %s2 = inlined_call_operand.vmem [shape: f32[240,32], index: 2, kind: input, shape index: {}]
  %s3 = inlined_call_operand.vmem [shape: f32[2,8,512], index: 3, kind: input, shape index: {}]
  %s4 = inlined_call_operand.vmem [shape: bf16[8,72], index: 4, kind: input, shape index: {}]
  %s5 = inlined_call_operand.hbm [shape: f32[2,32], index: 5, kind: output, shape index: {0}]
  %s6 = inlined_call_operand.hbm [shape: f32[2,8], index: 6, kind: output, shape index: {1}]
  %s7 = inlined_call_operand.vmem [shape: f32[8,768], index: 7, kind: output, shape index: {2}]
  %8 = xla_tuple %s5, %s6, %s7
  %s9 = sld [smem:[#allocation0]]
  $region46: #{gru_modulated_conv2d.1} parent=0
    _
  %s11 = ssub.s32 1, %s9
  %s12 = scalar_select 0, %s11, %s9
  $region1: #{gru_modulated_conv2d.1} parent=0
    #allocation2 [shape = 'u8[1024]{0}', space=vmem, size = 0x400, scoped, tag = 'output window, operand 0, single buffered']
    #allocation3 [shape = 's32[1]{0}', space=sflag, size = 0x4, scoped, tag = 'scoped memory for gru_modulated_conv2d.1']
    #allocation4 [shape = 'u8[1024]{0}', space=vmem, size = 0x400, scoped, tag = 'output window, operand 1, single buffered']
    #allocation5 [shape = 's32[1]{0}', space=sflag, size = 0x4, scoped, tag = 'scoped memory for gru_modulated_conv2d.1']
    %13 = vsyncpa [#allocation3], 0
    %14 = vsyncpa [#allocation5], 0
    // Predicated region
    $region2: #{gru_modulated_conv2d.1} parent=1 // pred_check
      _
    $region3: #{gru_modulated_conv2d.1} parent=1 // pred_check_branch
      %16 = sbr.rel (0) target = $region5
    $region4: #{gru_modulated_conv2d.1} parent=1 // pred_region
      _
    $region5: #{gru_modulated_conv2d.1} parent=1 // pred_fallthru
      _
    // Predicated region
    $region6: #{gru_modulated_conv2d.1} parent=1 // pred_check
      _
    $region7: #{gru_modulated_conv2d.1} parent=1 // pred_check_branch
      %18 = sbr.rel (0) target = $region9
    $region8: #{gru_modulated_conv2d.1} parent=1 // pred_region
      _
    $region9: #{gru_modulated_conv2d.1} parent=1 // pred_fallthru
      _
    // Predicated region
    $region10: #{gru_modulated_conv2d.1} parent=1 // pred_check
      _
    $region11: #{gru_modulated_conv2d.1} parent=1 // pred_check_branch
      %20 = sbr.rel (0) target = $region13
    $region12: #{gru_modulated_conv2d.1} parent=1 // pred_region
      _
    $region13: #{gru_modulated_conv2d.1} parent=1 // pred_fallthru
      _
    // Predicated region
    $region14: #{gru_modulated_conv2d.1} parent=1 // pred_check
      _
    $region15: #{gru_modulated_conv2d.1} parent=1 // pred_check_branch
      %22 = sbr.rel (0) target = $region17
    $region16: #{gru_modulated_conv2d.1} parent=1 // pred_region
      _
    $region17: #{gru_modulated_conv2d.1} parent=1 // pred_fallthru
      _
    // Predicated region
    $region18: #{gru_modulated_conv2d.1} parent=1 // pred_check
      _
    $region19: #{gru_modulated_conv2d.1} parent=1 // pred_check_branch
      %24 = sbr.rel (0) target = $region21
    $region20: #{gru_modulated_conv2d.1} parent=1 // pred_region
      _
    $region21: #{gru_modulated_conv2d.1} parent=1 // pred_fallthru
      _
    %v26 = vld [vmem:[%s0] sm:$0x3]
    %v27 = vld [vmem:[%s1] sm:$0x3]
    %v28 = vld [vmem:[%s2] sm:$0xff]
    %v29 = vld [vmem:[%s2 + $0x8] sm:$0xff]
    %v30 = vld [vmem:[%s2 + $0x10] sm:$0xff]
    %v31 = vld [vmem:[%s2 + $0x18] sm:$0xff]
    %v32 = vld [vmem:[%s2 + $0x20] sm:$0xff]
    %v33 = vld [vmem:[%s2 + $0x28] sm:$0xff]
    %v34 = vld [vmem:[%s2 + $0x30] sm:$0xff]
    %v35 = vld [vmem:[%s2 + $0x38] sm:$0xff]
    %v36 = vld [vmem:[%s2 + $0x40] sm:$0xff]
    %v37 = vld [vmem:[%s2 + $0x48] sm:$0xff]
    %v38 = vld [vmem:[%s2 + $0x50] sm:$0xff]
    %v39 = vld [vmem:[%s2 + $0x58] sm:$0xff]
    %v40 = vld [vmem:[%s2 + $0x60] sm:$0xff]
    %v41 = vld [vmem:[%s2 + $0x68] sm:$0xff]
    %v42 = vld [vmem:[%s2 + $0x70] sm:$0xff]
    %v43 = vld [vmem:[%s2 + $0x78] sm:$0xff]
    %v44 = vld [vmem:[%s2 + $0x80] sm:$0xff]
    %v45 = vld [vmem:[%s2 + $0x88] sm:$0xff]
    %v46 = vld [vmem:[%s2 + $0x90] sm:$0xff]
    %v47 = vld [vmem:[%s2 + $0x98] sm:$0xff]
    %v48 = vld [vmem:[%s2 + $0xa0] sm:$0xff]
    %v49 = vld [vmem:[%s2 + $0xa8] sm:$0xff]
    %v50 = vld [vmem:[%s2 + $0xb0] sm:$0xff]
    %v51 = vld [vmem:[%s2 + $0xb8] sm:$0xff]
    %v52 = vld [vmem:[%s2 + $0xc0] sm:$0xff]
    %v53 = vld [vmem:[%s2 + $0xc8] sm:$0xff]
    %v54 = vld [vmem:[%s2 + $0xd0] sm:$0xff]
    %v55 = vld [vmem:[%s2 + $0xd8] sm:$0xff]
    %v56 = vld [vmem:[%s2 + $0xe0] sm:$0xff]
    %v57 = vld [vmem:[%s2 + $0xe8] sm:$0x1]
    %vm58 = vcmask 261120
    %v60 = vsel %vm58, %v26, 0
    %62 = vmatpush.msra.mxu0 0.0
    %63 = vmatpush.msra.mxu0 0.0
    %64 = vmatpush.msra.mxu0 0.0
    %65 = vmatpush.msra.mxu0 0.0
    %66 = vmatpush.msra.mxu0 0.0
    %67 = vmatpush.msra.mxu0 0.0
    %68 = vmatpush.msra.mxu0 0.0
    %69 = vmatpush.msra.mxu0 0.0
    %70 = vmatpush.msra.mxu0 0.0
    %71 = vmatpush.msra.mxu0 0.0
    %72 = vmatpush.msra.mxu0 0.0
    %73 = vmatpush.msra.mxu0 0.0
    %74 = vmatpush.msra.mxu0 %v43
    %75 = vmatpush.msra.mxu0 %v42
    %76 = vmatpush.msra.mxu0 %v41
    %77 = vmatpush.msra.mxu0 %v40
    %78 = vmatmul.f32.gmra.mxu0 %v60
    %v79 = vpop.f32.mrf.mxu0
    %v80 = vadd.f32 0.0, %v79
    %81 = vdwg.mxu0
    %v83 = vsel %vm58, %v27, 0
    %85 = vmatpush.msra.mxu0 0.0
    %86 = vmatpush.msra.mxu0 0.0
    %87 = vmatpush.msra.mxu0 0.0
    %88 = vmatpush.msra.mxu0 0.0
    %89 = vmatpush.msra.mxu0 0.0
    %90 = vmatpush.msra.mxu0 0.0
    %91 = vmatpush.msra.mxu0 0.0
    %92 = vmatpush.msra.mxu0 0.0
    %93 = vmatpush.msra.mxu0 0.0
    %94 = vmatpush.msra.mxu0 0.0
    %95 = vmatpush.msra.mxu0 0.0
    %96 = vmatpush.msra.mxu0 0.0
    %97 = vmatpush.msra.mxu0 %v31
    %98 = vmatpush.msra.mxu0 %v30
    %99 = vmatpush.msra.mxu0 %v29
    %100 = vmatpush.msra.mxu0 %v28
    %101 = vmatmul.f32.gmra.mxu0 %v83
    %v102 = vpop.f32.mrf.mxu0
    %v103 = vadd.f32 %v80, %v102
    %104 = vdwg.mxu0
    %v105 = vperm.slane %v52, 0
    %v106 = vadd.f32 %v103, %v105
    %v107 = vxor.u32 %v106, 2147483648
    %v108 = vmul.f32 %v107, 1.442695
    %v109 = vpow.pop %v108
    %v110 = vadd.f32 %v109, 1.0
    %v111 = vrcp.pop %v110
    %v112 = vmul.f32 %v110, %v111
    %v113 = vsub.f32 1.0, %v112
    %v114 = vmul.f32 %v111, %v113
    %v115 = vadd.f32 %v111, %v114
    %vm116 = vweird.f32 %v110
    %vm117 = vweird.f32 %v111
    %vm118 = vmor %vm116, %vm117
    %v119 = vsel %vm118, %v111, %v115
    %v120 = vand.u32 2147483647, %v110
    %vm121 = vcmp.eq.f32.partialorder %v120, 8.507059e+37
    %v122 = vand.u32 %v110, 2147483648
    %v123 = vor.u32 1.1754944e-38, %v122
    %v124 = vsel %vm121, %v123, %v119
    %v125 = vmul.f32 1.0, %v124
    %126 = vmatpush.msra.mxu0 0.0
    %127 = vmatpush.msra.mxu0 0.0
    %128 = vmatpush.msra.mxu0 0.0
    %129 = vmatpush.msra.mxu0 0.0
    %130 = vmatpush.msra.mxu0 0.0
    %131 = vmatpush.msra.mxu0 0.0
    %132 = vmatpush.msra.mxu0 0.0
    %133 = vmatpush.msra.mxu0 0.0
    %134 = vmatpush.msra.mxu0 0.0
    %135 = vmatpush.msra.mxu0 0.0
    %136 = vmatpush.msra.mxu0 0.0
    %137 = vmatpush.msra.mxu0 0.0
    %138 = vmatpush.msra.mxu0 %v47
    %139 = vmatpush.msra.mxu0 %v46
    %140 = vmatpush.msra.mxu0 %v45
    %141 = vmatpush.msra.mxu0 %v44
    %142 = vmatmul.f32.gmra.mxu0 %v60
    %v143 = vpop.f32.mrf.mxu0
    %v144 = vadd.f32 0.0, %v143
    %145 = vdwg.mxu0
    %146 = vmatpush.msra.mxu0 0.0
    %147 = vmatpush.msra.mxu0 0.0
    %148 = vmatpush.msra.mxu0 0.0
    %149 = vmatpush.msra.mxu0 0.0
    %150 = vmatpush.msra.mxu0 0.0
    %151 = vmatpush.msra.mxu0 0.0
    %152 = vmatpush.msra.mxu0 0.0
    %153 = vmatpush.msra.mxu0 0.0
    %154 = vmatpush.msra.mxu0 0.0
    %155 = vmatpush.msra.mxu0 0.0
    %156 = vmatpush.msra.mxu0 0.0
    %157 = vmatpush.msra.mxu0 0.0
    %158 = vmatpush.msra.mxu0 %v35
    %159 = vmatpush.msra.mxu0 %v34
    %160 = vmatpush.msra.mxu0 %v33
    %161 = vmatpush.msra.mxu0 %v32
    %162 = vmatmul.f32.gmra.mxu0 %v83
    %v163 = vpop.f32.mrf.mxu0
    %v164 = vadd.f32 %v144, %v163
    %165 = vdwg.mxu0
    %v166 = vperm.slane %v52, 1
    %v167 = vadd.f32 %v164, %v166
    %v168 = vxor.u32 %v167, 2147483648
    %v169 = vmul.f32 %v168, 1.442695
    %v170 = vpow.pop %v169
    %v171 = vadd.f32 %v170, 1.0
    %v172 = vrcp.pop %v171
    %v173 = vmul.f32 %v171, %v172
    %v174 = vsub.f32 1.0, %v173
    %v175 = vmul.f32 %v172, %v174
    %v176 = vadd.f32 %v172, %v175
    %vm177 = vweird.f32 %v171
    %vm178 = vweird.f32 %v172
    %vm179 = vmor %vm177, %vm178
    %v180 = vsel %vm179, %v172, %v176
    %v181 = vand.u32 2147483647, %v171
    %vm182 = vcmp.eq.f32.partialorder %v181, 8.507059e+37
    %v183 = vand.u32 %v171, 2147483648
    %v184 = vor.u32 1.1754944e-38, %v183
    %v185 = vsel %vm182, %v184, %v180
    %v186 = vmul.f32 1.0, %v185
    %v187 = vperm.slane %v52, 2
    %188 = vmatpush.msra.mxu0 0.0
    %189 = vmatpush.msra.mxu0 0.0
    %190 = vmatpush.msra.mxu0 0.0
    %191 = vmatpush.msra.mxu0 0.0
    %192 = vmatpush.msra.mxu0 0.0
    %193 = vmatpush.msra.mxu0 0.0
    %194 = vmatpush.msra.mxu0 0.0
    %195 = vmatpush.msra.mxu0 0.0
    %196 = vmatpush.msra.mxu0 0.0
    %197 = vmatpush.msra.mxu0 0.0
    %198 = vmatpush.msra.mxu0 0.0
    %199 = vmatpush.msra.mxu0 0.0
    %200 = vmatpush.msra.mxu0 %v39
    %201 = vmatpush.msra.mxu0 %v38
    %202 = vmatpush.msra.mxu0 %v37
    %203 = vmatpush.msra.mxu0 %v36
    %204 = vmatmul.f32.gmra.mxu0 %v83
    %v205 = vpop.f32.mrf.mxu0
    %v206 = vadd.f32 %v187, %v205
    %207 = vdwg.mxu0
    %v208 = vperm.slane %v52, 3
    %209 = vmatpush.msra.mxu0 0.0
    %210 = vmatpush.msra.mxu0 0.0
    %211 = vmatpush.msra.mxu0 0.0
    %212 = vmatpush.msra.mxu0 0.0
    %213 = vmatpush.msra.mxu0 0.0
    %214 = vmatpush.msra.mxu0 0.0
    %215 = vmatpush.msra.mxu0 0.0
    %216 = vmatpush.msra.mxu0 0.0
    %217 = vmatpush.msra.mxu0 0.0
    %218 = vmatpush.msra.mxu0 0.0
    %219 = vmatpush.msra.mxu0 0.0
    %220 = vmatpush.msra.mxu0 0.0
    %221 = vmatpush.msra.mxu0 %v51
    %222 = vmatpush.msra.mxu0 %v50
    %223 = vmatpush.msra.mxu0 %v49
    %224 = vmatpush.msra.mxu0 %v48
    %225 = vmatmul.f32.gmra.mxu0 %v60
    %v226 = vpop.f32.mrf.mxu0
    %v227 = vadd.f32 %v208, %v226
    %228 = vdwg.mxu0
    %v229 = vmul.f32 %v125, %v227
    %v230 = vadd.f32 %v206, %v229
    %v231 = vtanh.pop %v230
    %v232 = vsub.f32 1.0, %v186
    %v233 = vmul.f32 %v232, %v231
    %v234 = vmul.f32 %v186, %v26
    %v235 = vadd.f32 %v233, %v234
    %vm236 = vcmask 254976
    %237 = vst.msk [vmem:[#allocation2] sm:$0x3] %vm236, %v235
    %v238 = vperm.slane %v57, 0
    %v240 = vsel %vm58, %v235, 0
    %242 = vmatpush.msra.mxu0 0.0
    %243 = vmatpush.msra.mxu0 0.0
    %244 = vmatpush.msra.mxu0 0.0
    %245 = vmatpush.msra.mxu0 0.0
    %246 = vmatpush.msra.mxu0 0.0
    %247 = vmatpush.msra.mxu0 0.0
    %248 = vmatpush.msra.mxu0 0.0
    %249 = vmatpush.msra.mxu0 0.0
    %250 = vmatpush.msra.mxu0 0.0
    %251 = vmatpush.msra.mxu0 0.0
    %252 = vmatpush.msra.mxu0 0.0
    %253 = vmatpush.msra.mxu0 0.0
    %254 = vmatpush.msra.mxu0 %v56
    %255 = vmatpush.msra.mxu0 %v55
    %256 = vmatpush.msra.mxu0 %v54
    %257 = vmatpush.msra.mxu0 %v53
    %258 = vmatmul.f32.gmra.mxu0 %v240
    %v259 = vpop.f32.mrf.mxu0
    %v260 = vadd.f32 %v238, %v259
    %261 = vdwg.mxu0
    %v262 = vsel %vm236, %v260, -inf
    %263 = vmax.xlane.f32.xlu0 %v262
    %v264 = vpop.xlane.xlu0 %263
    %v265 = vsub.f32 %v260, %v264
    %v266 = vmul.f32 %v265, 0.5
    %v267 = vmul.f32 %v266, 1.442695
    %v268 = vpow.pop %v267
    %v269 = vmul.f32 %v268, %v268
    %v270 = vsel %vm236, %v269, 0.0
    %271 = vadd.xlane.f32.xlu0 %v270
    %v272 = vpop.xlane.xlu0 %271
    %v273 = vrsqrt.pop %v272
    %v274 = vmul.f32 %v273, %v272
    %v275 = vmul.f32 %v274, %v273
    %v276 = vmul.f32 0.5, %v275
    %v277 = vsub.f32 1.5, %v276
    %v278 = vmul.f32 %v273, %v277
    %vm279 = vweird.f32 %v272
    %vm280 = vweird.f32 %v273
    %vm281 = vmor %vm279, %vm280
    %v282 = vsel %vm281, %v273, %v278
    %v283 = vmul.f32 %v268, %v282
    %vm284 = vcmask 58368
    %285 = vst.msk [vmem:[#allocation4] sm:$0x3] %vm284, %v283
    %v286 = vld [vmem:[%s3] sm:$0xff]
    %v287 = vld [vmem:[%s3 + $0x8] sm:$0xff]
    %v288 = vld [vmem:[%s3 + $0x10] sm:$0xff]
    %v289 = vld [vmem:[%s3 + $0x18] sm:$0xff]
    %v290 = vld [vmem:[%s3 + $0x20] sm:$0xff]
    %v291 = vld [vmem:[%s3 + $0x28] sm:$0xff]
    %v292 = vld [vmem:[%s3 + $0x30] sm:$0xff]
    %v293 = vld [vmem:[%s3 + $0x38] sm:$0xff]
    %v294 = vperm.slane %v283, 0
    %v295 = vlaneseq
    %v296 = vshrl.u32 %v295, 7
    %298 = vset.pattern.permute.xlu0 %v296
    %299 = vperm.xlu0 %298, %v294
    %v300 = vpop.permute.xlu0 %299
    %v301 = vperm.slane %v283, 1
    %v302 = vlaneseq
    %v303 = vshrl.u32 %v302, 7
    %305 = vset.pattern.permute.xlu0 %v303
    %306 = vperm.xlu0 %305, %v301
    %v307 = vpop.permute.xlu0 %306
    %v308 = vmul.f32 %v286, %v300
    %v309 = vmul.f32 %v287, %v300
    %v310 = vmul.f32 %v288, %v300
    %v311 = vmul.f32 %v289, %v300
    %v312 = vmul.f32 %v290, %v307
    %v313 = vmul.f32 %v291, %v307
    %v314 = vmul.f32 %v292, %v307
    %v315 = vmul.f32 %v293, %v307
    %320 = vrot.lane.b32.xlu0 %v308, 127
    %v321 = vpop.permute.xlu0 %320
    %322 = vrot.lane.b32.xlu0 %v309, 127
    %v323 = vpop.permute.xlu0 %322
    %324 = vrot.lane.b32.xlu0 %v310, 127
    %v325 = vpop.permute.xlu0 %324
    %326 = vrot.lane.b32.xlu0 %v311, 127
    %v327 = vpop.permute.xlu0 %326
    %vm328 = vcmask 1039360
    %v329 = vsel %vm328, %v321, %v323
    %v330 = vsel %vm328, %v323, %v325
    %v331 = vsel %vm328, %v325, %v327
    %335 = vrot.lane.b32.xlu0 %v308, 126
    %v336 = vpop.permute.xlu0 %335
    %337 = vrot.lane.b32.xlu0 %v309, 126
    %v338 = vpop.permute.xlu0 %337
    %339 = vrot.lane.b32.xlu0 %v310, 126
    %v340 = vpop.permute.xlu0 %339
    %341 = vrot.lane.b32.xlu0 %v311, 126
    %v342 = vpop.permute.xlu0 %341
    %vm343 = vcmask 1031168
    %v344 = vsel %vm343, %v336, %v338
    %v345 = vsel %vm343, %v338, %v340
    %v346 = vsel %vm343, %v340, %v342
    %350 = vrot.lane.b32.xlu0 %v308, 110
    %v351 = vpop.permute.xlu0 %350
    %352 = vrot.lane.b32.xlu0 %v309, 110
    %v353 = vpop.permute.xlu0 %352
    %354 = vrot.lane.b32.xlu0 %v310, 110
    %v355 = vpop.permute.xlu0 %354
    %356 = vrot.lane.b32.xlu0 %v311, 110
    %v357 = vpop.permute.xlu0 %356
    %vm358 = vcmask 900096
    %v359 = vsel %vm358, %v351, %v353
    %v360 = vsel %vm358, %v353, %v355
    %v361 = vsel %vm358, %v355, %v357
    %365 = vrot.lane.b32.xlu0 %v308, 109
    %v366 = vpop.permute.xlu0 %365
    %367 = vrot.lane.b32.xlu0 %v309, 109
    %v368 = vpop.permute.xlu0 %367
    %369 = vrot.lane.b32.xlu0 %v310, 109
    %v370 = vpop.permute.xlu0 %369
    %371 = vrot.lane.b32.xlu0 %v311, 109
    %v372 = vpop.permute.xlu0 %371
    %vm373 = vcmask 891904
    %v374 = vsel %vm373, %v366, %v368
    %v375 = vsel %vm373, %v368, %v370
    %v376 = vsel %vm373, %v370, %v372
    %380 = vrot.lane.b32.xlu0 %v308, 108
    %v381 = vpop.permute.xlu0 %380
    %382 = vrot.lane.b32.xlu0 %v309, 108
    %v383 = vpop.permute.xlu0 %382
    %384 = vrot.lane.b32.xlu0 %v310, 108
    %v385 = vpop.permute.xlu0 %384
    %386 = vrot.lane.b32.xlu0 %v311, 108
    %v387 = vpop.permute.xlu0 %386
    %vm388 = vcmask 883712
    %v389 = vsel %vm388, %v381, %v383
    %v390 = vsel %vm388, %v383, %v385
    %v391 = vsel %vm388, %v385, %v387
    %395 = vrot.lane.b32.xlu0 %v308, 92
    %v396 = vpop.permute.xlu0 %395
    %397 = vrot.lane.b32.xlu0 %v309, 92
    %v398 = vpop.permute.xlu0 %397
    %399 = vrot.lane.b32.xlu0 %v310, 92
    %v400 = vpop.permute.xlu0 %399
    %401 = vrot.lane.b32.xlu0 %v311, 92
    %v402 = vpop.permute.xlu0 %401
    %vm403 = vcmask 752640
    %v404 = vsel %vm403, %v396, %v398
    %v405 = vsel %vm403, %v398, %v400
    %v406 = vsel %vm403, %v400, %v402
    %410 = vrot.lane.b32.xlu0 %v308, 91
    %v411 = vpop.permute.xlu0 %410
    %412 = vrot.lane.b32.xlu0 %v309, 91
    %v413 = vpop.permute.xlu0 %412
    %414 = vrot.lane.b32.xlu0 %v310, 91
    %v415 = vpop.permute.xlu0 %414
    %416 = vrot.lane.b32.xlu0 %v311, 91
    %v417 = vpop.permute.xlu0 %416
    %vm418 = vcmask 744448
    %v419 = vsel %vm418, %v411, %v413
    %v420 = vsel %vm418, %v413, %v415
    %v421 = vsel %vm418, %v415, %v417
    %425 = vrot.lane.b32.xlu0 %v308, 90
    %v426 = vpop.permute.xlu0 %425
    %427 = vrot.lane.b32.xlu0 %v309, 90
    %v428 = vpop.permute.xlu0 %427
    %429 = vrot.lane.b32.xlu0 %v310, 90
    %v430 = vpop.permute.xlu0 %429
    %431 = vrot.lane.b32.xlu0 %v311, 90
    %v432 = vpop.permute.xlu0 %431
    %vm433 = vcmask 736256
    %v434 = vsel %vm433, %v426, %v428
    %v435 = vsel %vm433, %v428, %v430
    %v436 = vsel %vm433, %v430, %v432
    %444 = vrot.lane.b32.xlu0 %v312, 127
    %v445 = vpop.permute.xlu0 %444
    %446 = vrot.lane.b32.xlu0 %v313, 127
    %v447 = vpop.permute.xlu0 %446
    %448 = vrot.lane.b32.xlu0 %v314, 127
    %v449 = vpop.permute.xlu0 %448
    %450 = vrot.lane.b32.xlu0 %v315, 127
    %v451 = vpop.permute.xlu0 %450
    %v452 = vsel %vm328, %v445, %v447
    %v453 = vsel %vm328, %v447, %v449
    %v454 = vsel %vm328, %v449, %v451
    %458 = vrot.lane.b32.xlu0 %v312, 126
    %v459 = vpop.permute.xlu0 %458
    %460 = vrot.lane.b32.xlu0 %v313, 126
    %v461 = vpop.permute.xlu0 %460
    %462 = vrot.lane.b32.xlu0 %v314, 126
    %v463 = vpop.permute.xlu0 %462
    %464 = vrot.lane.b32.xlu0 %v315, 126
    %v465 = vpop.permute.xlu0 %464
    %v466 = vsel %vm343, %v459, %v461
    %v467 = vsel %vm343, %v461, %v463
    %v468 = vsel %vm343, %v463, %v465
    %472 = vrot.lane.b32.xlu0 %v312, 110
    %v473 = vpop.permute.xlu0 %472
    %474 = vrot.lane.b32.xlu0 %v313, 110
    %v475 = vpop.permute.xlu0 %474
    %476 = vrot.lane.b32.xlu0 %v314, 110
    %v477 = vpop.permute.xlu0 %476
    %478 = vrot.lane.b32.xlu0 %v315, 110
    %v479 = vpop.permute.xlu0 %478
    %v480 = vsel %vm358, %v473, %v475
    %v481 = vsel %vm358, %v475, %v477
    %v482 = vsel %vm358, %v477, %v479
    %486 = vrot.lane.b32.xlu0 %v312, 109
    %v487 = vpop.permute.xlu0 %486
    %488 = vrot.lane.b32.xlu0 %v313, 109
    %v489 = vpop.permute.xlu0 %488
    %490 = vrot.lane.b32.xlu0 %v314, 109
    %v491 = vpop.permute.xlu0 %490
    %492 = vrot.lane.b32.xlu0 %v315, 109
    %v493 = vpop.permute.xlu0 %492
    %v494 = vsel %vm373, %v487, %v489
    %v495 = vsel %vm373, %v489, %v491
    %v496 = vsel %vm373, %v491, %v493
    %500 = vrot.lane.b32.xlu0 %v312, 108
    %v501 = vpop.permute.xlu0 %500
    %502 = vrot.lane.b32.xlu0 %v313, 108
    %v503 = vpop.permute.xlu0 %502
    %504 = vrot.lane.b32.xlu0 %v314, 108
    %v505 = vpop.permute.xlu0 %504
    %506 = vrot.lane.b32.xlu0 %v315, 108
    %v507 = vpop.permute.xlu0 %506
    %v508 = vsel %vm388, %v501, %v503
    %v509 = vsel %vm388, %v503, %v505
    %v510 = vsel %vm388, %v505, %v507
    %514 = vrot.lane.b32.xlu0 %v312, 92
    %v515 = vpop.permute.xlu0 %514
    %516 = vrot.lane.b32.xlu0 %v313, 92
    %v517 = vpop.permute.xlu0 %516
    %518 = vrot.lane.b32.xlu0 %v314, 92
    %v519 = vpop.permute.xlu0 %518
    %520 = vrot.lane.b32.xlu0 %v315, 92
    %v521 = vpop.permute.xlu0 %520
    %v522 = vsel %vm403, %v515, %v517
    %v523 = vsel %vm403, %v517, %v519
    %v524 = vsel %vm403, %v519, %v521
    %528 = vrot.lane.b32.xlu0 %v312, 91
    %v529 = vpop.permute.xlu0 %528
    %530 = vrot.lane.b32.xlu0 %v313, 91
    %v531 = vpop.permute.xlu0 %530
    %532 = vrot.lane.b32.xlu0 %v314, 91
    %v533 = vpop.permute.xlu0 %532
    %534 = vrot.lane.b32.xlu0 %v315, 91
    %v535 = vpop.permute.xlu0 %534
    %v536 = vsel %vm418, %v529, %v531
    %v537 = vsel %vm418, %v531, %v533
    %v538 = vsel %vm418, %v533, %v535
    %542 = vrot.lane.b32.xlu0 %v312, 90
    %v543 = vpop.permute.xlu0 %542
    %544 = vrot.lane.b32.xlu0 %v313, 90
    %v545 = vpop.permute.xlu0 %544
    %546 = vrot.lane.b32.xlu0 %v314, 90
    %v547 = vpop.permute.xlu0 %546
    %548 = vrot.lane.b32.xlu0 %v315, 90
    %v549 = vpop.permute.xlu0 %548
    %v550 = vsel %vm433, %v543, %v545
    %v551 = vsel %vm433, %v545, %v547
    %v552 = vsel %vm433, %v547, %v549
    %v556 = vpack.c.bf16 %v329, %v308
    %v557 = vpack.c.bf16 %v330, %v309
    %v558 = vpack.c.bf16 %v331, %v310
    %v559 = vpack.c.bf16 %v452, %v312
    %v560 = vpack.c.bf16 %v453, %v313
    %v561 = vpack.c.bf16 %v454, %v314
    %v562 = vpack.c.bf16 %v359, %v344
    %v563 = vpack.c.bf16 %v360, %v345
    %v564 = vpack.c.bf16 %v361, %v346
    %v565 = vpack.c.bf16 %v480, %v466
    %v566 = vpack.c.bf16 %v481, %v467
    %v567 = vpack.c.bf16 %v482, %v468
    %v568 = vpack.c.bf16 %v389, %v374
    %v569 = vpack.c.bf16 %v390, %v375
    %v570 = vpack.c.bf16 %v391, %v376
    %v571 = vpack.c.bf16 %v508, %v494
    %v572 = vpack.c.bf16 %v509, %v495
    %v573 = vpack.c.bf16 %v510, %v496
    %v574 = vpack.c.bf16 %v419, %v404
    %v575 = vpack.c.bf16 %v420, %v405
    %v576 = vpack.c.bf16 %v421, %v406
    %v577 = vpack.c.bf16 %v536, %v522
    %v578 = vpack.c.bf16 %v537, %v523
    %v579 = vpack.c.bf16 %v538, %v524
    %v580 = vpack.c.bf16 %v434, %v434
    %v581 = vpack.c.bf16 %v435, %v435
    %v582 = vpack.c.bf16 %v436, %v436
    %v583 = vpack.c.bf16 %v550, %v550
    %v584 = vpack.c.bf16 %v551, %v551
    %v585 = vpack.c.bf16 %v552, %v552
    %v586 = vld [vmem:[%s4] sm:$0xf]
    %vm587 = vcmask 588800
    %v589 = vsel %vm587, %v586, 0
    %vm591 = vcmask 1043456
    %v593 = vsel %vm591, %v580, 0
    %v596 = vsel %vm591, %v581, 0
    %v599 = vsel %vm591, %v582, 0
    %v602 = vsel %vm591, %v583, 0
    %v605 = vsel %vm591, %v584, 0
    %v608 = vsel %vm591, %v585, 0
    %610 = vmatpush.bf16.msra.mxu0 0
    %611 = vmatpush.bf16.msra.mxu0 0
    %612 = vmatpush.bf16.msra.mxu0 0
    %613 = vmatpush.bf16.msra.mxu0 %v593
    %614 = vmatpush.bf16.msra.mxu0 %v574
    %615 = vmatpush.bf16.msra.mxu0 %v568
    %616 = vmatpush.bf16.msra.mxu0 %v562
    %617 = vmatpush.bf16.msra.mxu0 %v556
    %618 = vmatmul.bf16.gmra.mxu0 %v589
    %v619 = vpop.f32.mrf.mxu0
    %v620 = vadd.f32 0.0, %v619
    %v621 = vpop.f32.mrf.mxu0
    %622 = vdwg.mxu0
    %623 = vmatpush.bf16.msra.mxu0 0
    %624 = vmatpush.bf16.msra.mxu0 0
    %625 = vmatpush.bf16.msra.mxu0 0
    %626 = vmatpush.bf16.msra.mxu0 %v596
    %627 = vmatpush.bf16.msra.mxu0 %v575
    %628 = vmatpush.bf16.msra.mxu0 %v569
    %629 = vmatpush.bf16.msra.mxu0 %v563
    %630 = vmatpush.bf16.msra.mxu0 %v557
    %631 = vmatmul.bf16.gmra.mxu0 %v589
    %v632 = vpop.f32.mrf.mxu0
    %v633 = vadd.f32 0.0, %v632
    %v634 = vpop.f32.mrf.mxu0
    %635 = vdwg.mxu0
    %636 = vmatpush.bf16.msra.mxu0 0
    %637 = vmatpush.bf16.msra.mxu0 0
    %638 = vmatpush.bf16.msra.mxu0 0
    %639 = vmatpush.bf16.msra.mxu0 %v599
    %640 = vmatpush.bf16.msra.mxu0 %v576
    %641 = vmatpush.bf16.msra.mxu0 %v570
    %642 = vmatpush.bf16.msra.mxu0 %v564
    %643 = vmatpush.bf16.msra.mxu0 %v558
    %644 = vmatmul.bf16.gmra.mxu0 %v589
    %v645 = vpop.f32.mrf.mxu0
    %v646 = vadd.f32 0.0, %v645
    %v647 = vpop.f32.mrf.mxu0
    %648 = vdwg.mxu0
    %649 = vmatpush.bf16.msra.mxu0 0
    %650 = vmatpush.bf16.msra.mxu0 0
    %651 = vmatpush.bf16.msra.mxu0 0
    %652 = vmatpush.bf16.msra.mxu0 %v602
    %653 = vmatpush.bf16.msra.mxu0 %v577
    %654 = vmatpush.bf16.msra.mxu0 %v571
    %655 = vmatpush.bf16.msra.mxu0 %v565
    %656 = vmatpush.bf16.msra.mxu0 %v559
    %657 = vmatmul.bf16.gmra.mxu0 %v589
    %v658 = vpop.f32.mrf.mxu0
    %v659 = vadd.f32 0.0, %v658
    %v660 = vpop.f32.mrf.mxu0
    %661 = vdwg.mxu0
    %662 = vmatpush.bf16.msra.mxu0 0
    %663 = vmatpush.bf16.msra.mxu0 0
    %664 = vmatpush.bf16.msra.mxu0 0
    %665 = vmatpush.bf16.msra.mxu0 %v605
    %666 = vmatpush.bf16.msra.mxu0 %v578
    %667 = vmatpush.bf16.msra.mxu0 %v572
    %668 = vmatpush.bf16.msra.mxu0 %v566
    %669 = vmatpush.bf16.msra.mxu0 %v560
    %670 = vmatmul.bf16.gmra.mxu0 %v589
    %v671 = vpop.f32.mrf.mxu0
    %v672 = vadd.f32 0.0, %v671
    %v673 = vpop.f32.mrf.mxu0
    %674 = vdwg.mxu0
    %675 = vmatpush.bf16.msra.mxu0 0
    %676 = vmatpush.bf16.msra.mxu0 0
    %677 = vmatpush.bf16.msra.mxu0 0
    %678 = vmatpush.bf16.msra.mxu0 %v608
    %679 = vmatpush.bf16.msra.mxu0 %v579
    %680 = vmatpush.bf16.msra.mxu0 %v573
    %681 = vmatpush.bf16.msra.mxu0 %v567
    %682 = vmatpush.bf16.msra.mxu0 %v561
    %683 = vmatmul.bf16.gmra.mxu0 %v589
    %v684 = vpop.f32.mrf.mxu0
    %v685 = vadd.f32 0.0, %v684
    %v686 = vpop.f32.mrf.mxu0
    %687 = vdwg.mxu0
    %688 = vst [vmem:[%s7] sm:$0xff] %v620
    %689 = vst [vmem:[%s7 + $0x8] sm:$0xff] %v633
    %690 = vst [vmem:[%s7 + $0x10] sm:$0xff] %v646
    %691 = vst [vmem:[%s7 + $0x18] sm:$0xff] %v659
    %692 = vst [vmem:[%s7 + $0x20] sm:$0xff] %v672
    %693 = vst [vmem:[%s7 + $0x28] sm:$0xff] %v685
    // Predicated region
    $region22: #{gru_modulated_conv2d.1} parent=1 // pred_check
      _
    $region23: #{gru_modulated_conv2d.1} parent=1 // pred_check_branch
      %695 = sbr.rel (0) target = $region25
    $region24: #{gru_modulated_conv2d.1} parent=1 // pred_region
      %697 = vsyncadd [#allocation3], 0
      %s699 = sshll.u32 [#allocation2], 4
      %s700 = int_to_ptr.vmem [resolvable:$true] %s699
      %s701 = sshll.u32 %s5, 4
      %s702 = int_to_ptr.hbm [resolvable:$true] %s701
      %704 = dma.vmem_to_hbm [thread:$0]  %s700, 32, %s702, [#allocation3]
    $region25: #{gru_modulated_conv2d.1} parent=1 // pred_fallthru
      _
    // Predicated region
    $region26: #{gru_modulated_conv2d.1} parent=1 // pred_check
      _
    $region27: #{gru_modulated_conv2d.1} parent=1 // pred_check_branch
      %706 = sbr.rel (0) target = $region29
    $region28: #{gru_modulated_conv2d.1} parent=1 // pred_region
      %708 = vsyncadd [#allocation5], 0
      %s710 = sshll.u32 [#allocation4], 4
      %s711 = int_to_ptr.vmem [resolvable:$true] %s710
      %s712 = sshll.u32 %s6, 4
      %s713 = int_to_ptr.hbm [resolvable:$true] %s712
      %715 = dma.vmem_to_hbm [thread:$0]  %s711, 32, %s713, [#allocation5]
    $region29: #{gru_modulated_conv2d.1} parent=1 // pred_fallthru
      _
    // Predicated region
    $region30: #{gru_modulated_conv2d.1} parent=1 // pred_check
      _
    $region31: #{gru_modulated_conv2d.1} parent=1 // pred_check_branch
      %717 = sbr.rel (0) target = $region33
    $region32: #{gru_modulated_conv2d.1} parent=1 // pred_region
      _
    $region33: #{gru_modulated_conv2d.1} parent=1 // pred_fallthru
      _
    // Predicated region
    $region34: #{gru_modulated_conv2d.1} parent=1 // pred_check
      _
    $region35: #{gru_modulated_conv2d.1} parent=1 // pred_check_branch
      %719 = sbr.rel (0) target = $region37
    $region36: #{gru_modulated_conv2d.1} parent=1 // pred_region
      %721 = dma.done [#allocation3], 32
    $region37: #{gru_modulated_conv2d.1} parent=1 // pred_fallthru
      _
    // Predicated region
    $region38: #{gru_modulated_conv2d.1} parent=1 // pred_check
      _
    $region39: #{gru_modulated_conv2d.1} parent=1 // pred_check_branch
      %723 = sbr.rel (0) target = $region41
    $region40: #{gru_modulated_conv2d.1} parent=1 // pred_region
      %725 = dma.done [#allocation5], 32
    $region41: #{gru_modulated_conv2d.1} parent=1 // pred_fallthru
      _
    // Predicated region
    $region42: #{gru_modulated_conv2d.1} parent=1 // pred_check
      _
    $region43: #{gru_modulated_conv2d.1} parent=1 // pred_check_branch
      %727 = sbr.rel (0) target = $region45
    $region44: #{gru_modulated_conv2d.1} parent=1 // pred_region
      _
    $region45: #{gru_modulated_conv2d.1} parent=1 // pred_fallthru
      _
    %728 = vsyncpa [#allocation3], 1
    %729 = vsyncpa [#allocation5], 1

</llo_original>
